<compile_context>
chip_gen: v7x
topology: tpu7x:2x2x1
jax: 0.10.0
libtpu: 0.0.40
codegen_flags: <defaults>
</compile_context>

<pallas_src>
from collections import OrderedDict

import jax
import jax.numpy as jnp
from jax import lax
from jax.experimental import pallas as pl
from jax.experimental.pallas import tpu as pltpu


# --------------------------- chip-aware budgets -----------------------------

def _vmem_capacity_bytes():
    try:
        cap = int(pltpu.get_tpu_info().vmem_capacity_bytes)
        if cap > 0:
            return cap
    except Exception:
        pass
    return 64 << 20          # conservative fallback (v7x per-TensorCore size)


_VMEM_CAP = _vmem_capacity_bytes()
# Working-set target used for tile sizing (double-buffered blocks + temporaries
# must fit).  ~35 MiB on v7x (64 MiB VMEM), capped at 48 MiB on v5e/v6e.
_TILE_BUDGET = min(int(_VMEM_CAP * 0.55), 48 << 20)
# Scoped-VMEM limit handed to Mosaic (raises the 16/32 MiB defaults).
_VMEM_LIMIT = min(int(_VMEM_CAP * 0.75), 100 << 20)


def _cparams(sem):
    return pltpu.CompilerParams(dimension_semantics=sem,
                                vmem_limit_bytes=_VMEM_LIMIT)


def _pick_tile(n, need_fn, budget=_TILE_BUDGET, align=1):
    """Largest divisor d of n with need_fn(d) <= budget.  Prefers >=2 grid
    steps (so input DMA / compute / writeback overlap).  Non-full tiles must be
    a multiple of `align` (TPU sublane constraint when the dim is second-minor).
    TODO(synk): support ragged (non-divisor) tails with masked edge tiles."""
    cands = [d for d in range(1, n + 1)
             if n % d == 0 and (d == n or d % align == 0) and need_fn(d) <= budget]
    if not cands:
        return n
    multi = [d for d in cands if d < n]
    return max(multi) if (n > 1 and multi) else max(cands)


# ----------------------- K1: lateral conv1x1 (+ add) -----------------------

def _lateral_kernel(x_ref, w_ref, b_ref, o_ref):
    o_ref[...] = jnp.dot(x_ref[...], w_ref[...],
                         preferred_element_type=jnp.float32) + b_ref[...]


def _lateral_add_kernel(x_ref, w_ref, b_ref, t_ref, o_ref):
    o_ref[...] = (jnp.dot(x_ref[...], w_ref[...],
                          preferred_element_type=jnp.float32)
                  + b_ref[...] + t_ref[...])


def lateral_conv(x_nhwc, w, b, top_down=None):
    """1x1 conv (+bias), optionally fused with '+ top_down' (already upsampled).
    TODO(synk): fuse the nearest upsample of top_down into this kernel
    (coarse-resolution BlockSpec + in-kernel repeat) to drop one HBM pass."""
    B, H, W, Cin = x_nhwc.shape
    Cout = w.shape[1]
    N = B * H * W
    has_td = top_down is not None

    def need(tr):   # 2x pipelined buffers + 1 working copy for each operand
        per_row = 3 * Cin + 3 * Cout + (3 * Cout if has_td else 0)
        return 4 * (tr * per_row + Cin * Cout + Cout)

    TR = _pick_tile(N, need, align=8)
    grid = (N // TR,)
    xf = x_nhwc.reshape(N, Cin)                     # free: contiguous collapse
    out_spec = pl.BlockSpec((TR, Cout), lambda i: (i, 0))
    out_shape = jax.ShapeDtypeStruct((N, Cout), jnp.float32)
    cparams = _cparams(("parallel",))

    if not has_td:
        out = pl.pallas_call(
            _lateral_kernel, out_shape=out_shape, grid=grid,
            in_specs=[pl.BlockSpec((TR, Cin), lambda i: (i, 0)),
                      pl.BlockSpec((Cin, Cout), lambda i: (0, 0)),
                      pl.BlockSpec((1, Cout), lambda i: (0, 0))],
            out_specs=out_spec, compiler_params=cparams,
        )(xf, w, b)
    else:
        tf = top_down.reshape(N, Cout)
        out = pl.pallas_call(
            _lateral_add_kernel, out_shape=out_shape, grid=grid,
            in_specs=[pl.BlockSpec((TR, Cin), lambda i: (i, 0)),
                      pl.BlockSpec((Cin, Cout), lambda i: (0, 0)),
                      pl.BlockSpec((1, Cout), lambda i: (0, 0)),
                      pl.BlockSpec((TR, Cout), lambda i: (i, 0))],
            out_specs=out_spec, compiler_params=cparams,
        )(xf, w, b, tf)
    return out.reshape(B, H, W, Cout)


# ------------- K2: 3x3 conv + fused CBAM pooling / gate compute ------------

def conv3x3_cbam(x_nhwc, w, b, w1, w2):
    """Returns (y, gate): y = conv3x3(x)+bias  and
    gate = sigmoid(SE(maxpool(y)) + SE(avgpool(y))) + 1  with shape (B, Cout)."""
    B, H, W, Cin = x_nhwc.shape
    Cout = w.shape[-1]
    cr = w1.shape[1]
    Wp = W + 2
    # TODO(synk): fold the 1-px zero pad into the halo DMA (pre-zeroed buffer)
    # instead of a full XLA pad pass over last_inner.
    xp = jnp.pad(x_nhwc, ((0, 0), (1, 1), (1, 1), (0, 0)))

    def need(th):   # honest per-grid-step VMEM accounting (per batch element)
        halo = (th + 2) * Wp * Cin * 4            # one DMA halo buffer
        yblk = th * W * Cout * 4                  # one output block
        wbytes = (9 * Cin * Cout + Cout + 2 * Cout * cr) * 4
        # 2x DMA double-buffer + x value copy + per-tap slice temp,
        # 2x pipelined output + f32 accumulator + headroom, weights x2.
        return 3 * halo + 2 * th * W * Cin * 4 + 4 * yblk + 2 * wbytes

    TH = _pick_tile(H, need)      # TH is never a minor block dim: no alignment
    n_tiles = H // TH
    inv_hw = 1.0 / float(H * W)

    def kernel(xp_hbm, w_ref, b_ref, w1_ref, w2_ref,   # inputs
               y_ref, gate_ref,                        # outputs
               xbuf, sem, mx_acc, sm_acc):             # scratch
        bidx = pl.program_id(0)
        i = pl.program_id(1)
        n = pl.num_programs(1)

        def window(tile):
            return xp_hbm.at[bidx, pl.ds(tile * TH, TH + 2), :, :]

        def start_fetch(tile, slot):
            pltpu.make_async_copy(window(tile), xbuf.at[slot],
                                  sem.at[slot]).start()

        @pl.when(i == 0)
        def _():
            mx_acc[...] = jnp.full(mx_acc.shape, -jnp.inf, mx_acc.dtype)
            sm_acc[...] = jnp.zeros(sm_acc.shape, sm_acc.dtype)
            start_fetch(0, 0)

        slot = lax.rem(i, 2)
        # wait for the current tile's halo window
        pltpu.make_async_copy(window(i), xbuf.at[slot], sem.at[slot]).wait()

        # prefetch the next H-tile of the same batch element while computing
        @pl.when(i + 1 < n)
        def _():
            start_fetch(i + 1, 1 - slot)

        x = xbuf[slot]                                  # (TH+2, Wp, Cin)
        # 3x3 conv = 9 shift-accumulated MXU matmuls.  No im2col concat:
        # avoids materializing a 9x copy of the tile in VMEM.
        yt = None
        for dy in range(3):
            for dx in range(3):
                tap = lax.dot_general(
                    x[dy:dy + TH, dx:dx + W, :], w_ref[dy, dx],
                    dimension_numbers=(((2,), (0,)), ((), ())),
                    preferred_element_type=jnp.float32)
                yt = tap if yt is None else yt + tap
        yt = yt + b_ref[...]
        y_ref[...] = yt

        # running CBAM channel-pool accumulators for this batch element
        mx_acc[...] = jnp.maximum(mx_acc[...], jnp.max(yt, axis=(0, 1))[None, :])
        sm_acc[...] = sm_acc[...] + jnp.sum(yt, axis=(0, 1))[None, :]

        @pl.when(i == n - 1)
        def _():
            def se(v):
                h = jnp.maximum(jnp.dot(v, w1_ref[...],
                                        preferred_element_type=jnp.float32), 0.0)
                return jnp.dot(h, w2_ref[...],
                               preferred_element_type=jnp.float32)
            att = jax.nn.sigmoid(se(mx_acc[...]) + se(sm_acc[...] * inv_hw))
            gate_ref[...] = att + 1.0            # y*att + y == y*(att+1)

    y, gate = pl.pallas_call(
        kernel,
        out_shape=(jax.ShapeDtypeStruct((B, H, W, Cout), jnp.float32),
                   jax.ShapeDtypeStruct((B, 1, Cout), jnp.float32)),
        grid=(B, n_tiles),
        in_specs=[pl.BlockSpec(memory_space=pl.ANY),     # padded input stays in HBM
                  pl.BlockSpec((3, 3, Cin, Cout), lambda bb, ii: (0, 0, 0, 0)),
                  pl.BlockSpec((1, Cout), lambda bb, ii: (0, 0)),
                  pl.BlockSpec(w1.shape, lambda bb, ii: (0, 0)),
                  pl.BlockSpec(w2.shape, lambda bb, ii: (0, 0))],
        out_specs=(pl.BlockSpec((None, TH, W, Cout), lambda bb, ii: (bb, ii, 0, 0)),
                   pl.BlockSpec((None, 1, Cout), lambda bb, ii: (bb, 0, 0))),
        scratch_shapes=[pltpu.VMEM((2, TH + 2, Wp, Cin), jnp.float32),
                        pltpu.SemaphoreType.DMA((2,)),
                        pltpu.VMEM((1, Cout), jnp.float32),
                        pltpu.VMEM((1, Cout), jnp.float32)],
        # batch across cores (uses both TensorCores on v7x); H-tiles sequential
        # (carries the pooling accumulators + manual DMA slots).
        compiler_params=_cparams(("parallel", "arbitrary")),
    )(xp, w, b, w1, w2)
    return y, gate[:, 0, :]


# -------------------------- K3: CBAM gate apply -----------------------------

def _gate_kernel(y_ref, g_ref, o_ref):
    o_ref[...] = y_ref[...] * g_ref[...][:, None, :]


def gate_apply(y, gate):
    """out = y * gate, lane-dense: y viewed as (B, H, W*C) so stores use
    W*C-wide lanes instead of C-wide masked stores.
    TODO(synk): also fuse the final NHWC->NCHW transpose into this kernel."""
    B, H, W, C = y.shape
    WC = W * C
    yf = y.reshape(B, H, WC)                                   # free collapse
    gf = jnp.tile(gate[:, None, :], (1, W, 1)).reshape(B, WC)  # tiny (B, W*C)

    def need(th):   # 2x in + 2x out pipelined blocks + working copy
        return 4 * (5 * B * th * WC + B * WC)

    TH = _pick_tile(H, need, align=8)
    out = pl.pallas_call(
        _gate_kernel,
        out_shape=jax.ShapeDtypeStruct((B, H, WC), jnp.float32),
        grid=(H // TH,),
        in_specs=[pl.BlockSpec((B, TH, WC), lambda i: (0, i, 0)),
                  pl.BlockSpec((B, WC), lambda i: (0, 0))],
        out_specs=pl.BlockSpec((B, TH, WC), lambda i: (0, i, 0)),
        compiler_params=_cparams(("parallel",)),
    )(yf, gf)
    return out.reshape(B, H, W, C)


# ------------------------------- JAX glue -----------------------------------

def upsample_nearest(x_nhwc, out_h, out_w):
    # F.interpolate(mode='nearest', size=...): src = floor(dst * in / out)
    # TODO(synk): fuse the integer-scale case into lateral_conv (coarse-res
    # BlockSpec + in-kernel repeat) to remove one full HBM pass per level.
    B, h, w, C = x_nhwc.shape
    if out_h % h == 0 and out_w % w == 0:          # integer scale -> cheap repeat
        x = jnp.repeat(x_nhwc, out_h // h, axis=1)
        return jnp.repeat(x, out_w // w, axis=2)
    hi = (jnp.arange(out_h) * h) // out_h
    wi = (jnp.arange(out_w) * w) // out_w
    return x_nhwc[:, hi][:, :, wi]


def init_params(key, in_channels_list, out_channels, reduction=16):
    cr = max(out_channels // reduction, 1)
    params = []
    for cin in in_channels_list:
        key, k0, k1, k2, k3 = jax.random.split(key, 5)
        params.append(dict(
            # inner block: Conv2d(cin, out, 1) with bias (bias init = 0)
            inner_w=jax.random.uniform(k0, (cin, out_channels), jnp.float32,
                                       -1.0, 1.0) * (3.0 / cin) ** 0.5,
            inner_b=jnp.zeros((1, out_channels), jnp.float32),
            # layer block: Conv2d(out, out, 3, padding=1) with bias (bias init = 0)
            layer_w=jax.random.uniform(k1, (3, 3, out_channels, out_channels),
                                       jnp.float32, -1.0, 1.0)
                    * (3.0 / (9 * out_channels)) ** 0.5,
            layer_b=jnp.zeros((1, out_channels), jnp.float32),
            # CBAM channel-attention SE: Conv1x1 (no bias) x2
            se1_w=jax.random.uniform(k2, (out_channels, cr), jnp.float32,
                                     -1.0, 1.0) * (3.0 / out_channels) ** 0.5,
            se2_w=jax.random.uniform(k3, (cr, out_channels), jnp.float32,
                                     -1.0, 1.0) * (3.0 / cr) ** 0.5,
        ))
    return params


def _level(x_nhwc, p, top_down=None):
    last_inner = lateral_conv(x_nhwc, p['inner_w'], p['inner_b'], top_down)
    y, gate = conv3x3_cbam(last_inner, p['layer_w'], p['layer_b'],
                           p['se1_w'], p['se2_w'])
    return last_inner, gate_apply(y, gate)


def cbam_fpn_forward(feats_nchw, params):
    """Pallas implementation of CBAMv2FeaturePyramidNetwork.forward."""
    names = list(feats_nchw.keys())
    # TODO(synk): fuse the NCHW<->NHWC transposes into K1's in_spec / K3's
    # out_spec to remove two more HBM passes per level.
    xs = [jnp.transpose(v, (0, 2, 3, 1)) for v in feats_nchw.values()]  # -> NHWC
    n = len(xs)

    last_inner, res = _level(xs[-1], params[-1], None)
    results = [res]
    for idx in range(n - 2, -1, -1):
        H, W = xs[idx].shape[1], xs[idx].shape[2]
        top_down = upsample_nearest(last_inner, H, W)
        last_inner, res = _level(xs[idx], params[idx], top_down)
        results.insert(0, res)

    # TODO(synk): extra_blocks=None path only (no ExtraFPNBlock support).
    return OrderedDict(
        (k, jnp.transpose(v, (0, 3, 1, 2))) for k, v in zip(names, results))


# --------------------------- pure-JAX reference ----------------------------

def _ref_conv1x1(x, w, b):
    return jnp.einsum('bhwi,io->bhwo', x, w) + b.reshape(1, 1, 1, -1)


def _ref_conv3x3(x, w, b):
    xp = jnp.pad(x, ((0, 0), (1, 1), (1, 1), (0, 0)))
    H, W = x.shape[1], x.shape[2]
    out = sum(jnp.einsum('bhwi,io->bhwo', xp[:, dy:dy + H, dx:dx + W, :], w[dy, dx])
              for dy in range(3) for dx in range(3))
    return out + b.reshape(1, 1, 1, -1)


def _ref_cbam(x, w1, w2):
    mx = jnp.max(x, axis=(1, 2))
    av = jnp.mean(x, axis=(1, 2))
    se = lambda v: jnp.maximum(v @ w1, 0.0) @ w2
    att = jax.nn.sigmoid(se(mx) + se(av))
    return x * att[:, None, None, :] + x


def reference_forward(feats_nchw, params):
    names = list(feats_nchw.keys())
    xs = [jnp.transpose(v, (0, 2, 3, 1)) for v in feats_nchw.values()]
    n = len(xs)
    p = params[-1]
    last_inner = _ref_conv1x1(xs[-1], p['inner_w'], p['inner_b'])
    results = [_ref_cbam(_ref_conv3x3(last_inner, p['layer_w'], p['layer_b']),
                         p['se1_w'], p['se2_w'])]
    for idx in range(n - 2, -1, -1):
        p = params[idx]
        lat = _ref_conv1x1(xs[idx], p['inner_w'], p['inner_b'])
        td = upsample_nearest(last_inner, lat.shape[1], lat.shape[2])
        last_inner = lat + td
        results.insert(0, _ref_cbam(
            _ref_conv3x3(last_inner, p['layer_w'], p['layer_b']),
            p['se1_w'], p['se2_w']))
    return {k: jnp.transpose(v, (0, 3, 1, 2)) for k, v in zip(names, results)}


# --------------------------------- main ------------------------------------

if __name__ == "__main__":
    in_channels_list = [8, 16]
    out_channels = 32          # reduction=16 -> SE hidden = 2

    root = jax.random.PRNGKey(0)
    kparam, k0, k1 = jax.random.split(root, 3)
    params = init_params(kparam, in_channels_list, out_channels)

    feats = OrderedDict()
    feats['feat0'] = jax.random.normal(k0, (2, 8, 16, 16), jnp.float32)   # NCHW
    feats['feat1'] = jax.random.normal(k1, (2, 16, 8, 8), jnp.float32)    # NCHW

    out = cbam_fpn_forward(feats, params)
    out = {k: jax.block_until_ready(v) for k, v in out.items()}

    ref = reference_forward(feats, params)
    for k in feats:
        assert out[k].shape == (2, out_channels) + feats[k].shape[2:], out[k].shape
        assert jnp.allclose(out[k], ref[k], atol=1e-4, rtol=1e-4), \
            f"mismatch at {k}: max err {jnp.max(jnp.abs(out[k] - ref[k]))}"

    print("KERNEL_OK")
</pallas_src>

<mosaic_0001>
module attributes {stable_mosaic.version = 11 : i64} {
  func.func @_lateral_kernel(%arg0: i32, %arg1: memref<64x16xf32, #tpu.memory_space<vmem>>, %arg2: memref<16x32xf32, #tpu.memory_space<vmem>>, %arg3: memref<1x32xf32, #tpu.memory_space<vmem>>, %arg4: memref<64x32xf32, #tpu.memory_space<vmem>>) attributes {dimension_semantics = [#tpu.dimension_semantics<parallel>], iteration_bounds = array<i64: 2>, scalar_prefetch = 0 : i64, scratch_operands = 0 : i64, tpu.core_type = #tpu.core_type<tc>, window_params = [{transform_indices = @transform_0, window_bounds = array<i64: 64, 16>}, {pipeline_mode = #tpu.pipeline_mode<synchronous>, transform_indices = @transform_1, window_bounds = array<i64: 16, 32>}, {pipeline_mode = #tpu.pipeline_mode<synchronous>, transform_indices = @transform_2, window_bounds = array<i64: 1, 32>}, {transform_indices = @transform_3, window_bounds = array<i64: 64, 32>}]} {
    %c0 = arith.constant 0 : index
    %c0_0 = arith.constant 0 : index
    %0 = vector.load %arg1[%c0, %c0_0] : memref<64x16xf32, #tpu.memory_space<vmem>>, vector<64x16xf32>
    %c0_1 = arith.constant 0 : index
    %c0_2 = arith.constant 0 : index
    %1 = vector.load %arg2[%c0_1, %c0_2] : memref<16x32xf32, #tpu.memory_space<vmem>>, vector<16x32xf32>
    %cst = arith.constant dense<0.000000e+00> : vector<64x32xf32>
    %2 = tpu.matmul %0, %1, %cst {dimension_numbers = #tpu.dot_dimension_numbers<[1], [0], [0], [1], [0, 0, 1, 1], [], []>} : vector<64x16xf32>, vector<16x32xf32>, vector<64x32xf32> -> vector<64x32xf32>
    %c0_3 = arith.constant 0 : index
    %c0_4 = arith.constant 0 : index
    %3 = vector.load %arg3[%c0_3, %c0_4] : memref<1x32xf32, #tpu.memory_space<vmem>>, vector<1x32xf32>
    %4 = vector.broadcast %3 : vector<1x32xf32> to vector<64x32xf32>
    %5 = arith.addf %2, %4 : vector<64x32xf32>
    %c0_5 = arith.constant 0 : index
    %c0_6 = arith.constant 0 : index
    %6 = vector.load %arg4[%c0_5, %c0_6] : memref<64x32xf32, #tpu.memory_space<vmem>>, vector<64x32xf32>
    tpu.vector_store %arg4[%c0_5, %c0_6], %5 {strides = array<i32>} : memref<64x32xf32, #tpu.memory_space<vmem>>, vector<64x32xf32>,
    return
  }
  func.func @transform_0(%arg0: i32) -> (i32, i32) {
    %c0_i32 = arith.constant 0 : i32
    %c0_i32_0 = arith.constant 0 : i32
    return %arg0, %c0_i32 : i32, i32
  }
  func.func @transform_1(%arg0: i32) -> (i32, i32) {
    %c0_i32 = arith.constant 0 : i32
    %c0_i32_0 = arith.constant 0 : i32
    %c0_i32_1 = arith.constant 0 : i32
    return %c0_i32, %c0_i32_0 : i32, i32
  }
  func.func @transform_2(%arg0: i32) -> (i32, i32) {
    %c0_i32 = arith.constant 0 : i32
    %c0_i32_0 = arith.constant 0 : i32
    %c0_i32_1 = arith.constant 0 : i32
    return %c0_i32, %c0_i32_0 : i32, i32
  }
  func.func @transform_3(%arg0: i32) -> (i32, i32) {
    %c0_i32 = arith.constant 0 : i32
    %c0_i32_0 = arith.constant 0 : i32
    return %arg0, %c0_i32 : i32, i32
  }
}

</mosaic_0001>

<llo_original>
// kernel: tpu_custom_call.1
$region0: #{tpu_custom_call.1}
  #allocation0 [shape = 'u32[]', space=smem, size = 0x4, offset = 0x4, fixed_abs, tag = 'smem constant byte address 0x4 - core index']
  #allocation1 [shape = 'u32[144,128]{1,0:T(1,128)}', space=vmem, size = 0x12000, scoped, tag = 'internal scratch']
  %s0 = inlined_call_operand.vmem [shape: f32[128,16], index: 0, kind: input, shape index: {}]
  %s1 = inlined_call_operand.vmem [shape: f32[16,32], index: 1, kind: input, shape index: {}]
  %s2 = inlined_call_operand.vmem [shape: f32[1,32], index: 2, kind: input, shape index: {}]
  %s3 = inlined_call_operand.vmem [shape: f32[128,32], index: 3, kind: output, shape index: {}]
  %s4 = sld [smem:[#allocation0]]
  $region45: #{tpu_custom_call.1} parent=0
    _
  %s6 = ssub.s32 1, %s4
  %s7 = scalar_select 0, %s6, %s4
  loop: start=0, step=1, limit=4
  $region2: #{tpu_custom_call.1} parent=0 // loop_pre_header
    _
  $region3: #{tpu_custom_call.1} parent=0 // loop_header
    %s9 = sphi 0, %s13
    %p10 = scmp.ge.s32.totalorder %s9, 4
    %s19 = sphi 0, %s21
    %s22 = sphi 0, %s19
    %s23 = sphi 0, %s22
    %s39 = sphi 0, %s23
    %s43 = sphi 0, %s43
    %s45 = sphi 0, %s43
    %s46 = sphi 0, %s45
    %s60 = sphi 0, %s46
    %s64 = sphi 0, %s64
    %s66 = sphi 0, %s64
    %s67 = sphi 0, %s66
    %s81 = sphi 0, %s67
    %s87 = sphi 0, %s89
    %s90 = sphi 0, %s87
    %s91 = sphi 0, %s90
    %s107 = sphi 0, %s91
  $region4: #{tpu_custom_call.1} parent=0 // loop_header_branch
    %12 = sbr.rel (%p10) target = $region8
  $region5: #{tpu_custom_call.1} parent=0 // loop_body
    %s14 = ssub.s32 %s9, 1
    %s15 = ssub.s32 %s9, 2
    %s16 = sadd.s32 %s9, 1
    %s17 = ssub.s32 %s9, %s16
    %p18 = scmp.eq.s32.totalorder %s17, 0
    %s20 = sadd.s32 %s19, 1
    %s21 = scalar_select %p18, %s19, %s20
    %p24 = pneg %p18
    %p25 = scmp.eq.s32.totalorder %s9, 1
    %p26 = por %p24, %p25
    %p27 = scmp.ne.s32.totalorder %s19, %s22
    %p28 = scmp.eq.s32.totalorder %s9, 0
    %p29 = por %p27, %p28
    %p30 = scmp.ne.s32.totalorder %s19, %s22
    %p31 = scmp.eq.s32.totalorder %s14, 1
    %p32 = por %p30, %p31
    %p33 = scmp.ne.s32.totalorder %s22, %s23
    %p34 = scmp.eq.s32.totalorder %s14, 0
    %p35 = por %p33, %p34
    %p36 = scmp.ne.s32.totalorder %s22, %s23
    %p37 = scmp.eq.s32.totalorder %s15, 1
    %p38 = por %p36, %p37
    %p40 = scmp.ne.s32.totalorder %s23, %s39
    %p41 = scmp.eq.s32.totalorder %s15, 0
    %p42 = por %p40, %p41
    %s44 = sadd.s32 %s43, 1
    %p47 = scmp.eq.s32.totalorder %s9, 1
    %p48 = scmp.ne.s32.totalorder %s43, %s45
    %p49 = scmp.eq.s32.totalorder %s9, 0
    %p50 = por %p48, %p49
    %p51 = scmp.ne.s32.totalorder %s43, %s45
    %p52 = scmp.eq.s32.totalorder %s14, 1
    %p53 = por %p51, %p52
    %p54 = scmp.ne.s32.totalorder %s45, %s46
    %p55 = scmp.eq.s32.totalorder %s14, 0
    %p56 = por %p54, %p55
    %p57 = scmp.ne.s32.totalorder %s45, %s46
    %p58 = scmp.eq.s32.totalorder %s15, 1
    %p59 = por %p57, %p58
    %p61 = scmp.ne.s32.totalorder %s46, %s60
    %p62 = scmp.eq.s32.totalorder %s15, 0
    %p63 = por %p61, %p62
    %s65 = sadd.s32 %s64, 1
    %p68 = scmp.eq.s32.totalorder %s9, 1
    %p69 = scmp.ne.s32.totalorder %s64, %s66
    %p70 = scmp.eq.s32.totalorder %s9, 0
    %p71 = por %p69, %p70
    %p72 = scmp.ne.s32.totalorder %s64, %s66
    %p73 = scmp.eq.s32.totalorder %s14, 1
    %p74 = por %p72, %p73
    %p75 = scmp.ne.s32.totalorder %s66, %s67
    %p76 = scmp.eq.s32.totalorder %s14, 0
    %p77 = por %p75, %p76
    %p78 = scmp.ne.s32.totalorder %s66, %s67
    %p79 = scmp.eq.s32.totalorder %s15, 1
    %p80 = por %p78, %p79
    %p82 = scmp.ne.s32.totalorder %s67, %s81
    %p83 = scmp.eq.s32.totalorder %s15, 0
    %p84 = por %p82, %p83
    %s85 = ssub.s32 %s9, %s16
    %p86 = scmp.eq.s32.totalorder %s85, 0
    %s88 = sadd.s32 %s87, 1
    %s89 = scalar_select %p86, %s87, %s88
    %p92 = pneg %p86
    %p93 = scmp.eq.s32.totalorder %s9, 1
    %p94 = por %p92, %p93
    %p95 = scmp.ne.s32.totalorder %s87, %s90
    %p96 = scmp.eq.s32.totalorder %s9, 0
    %p97 = por %p95, %p96
    %p98 = scmp.ne.s32.totalorder %s87, %s90
    %p99 = scmp.eq.s32.totalorder %s14, 1
    %p100 = por %p98, %p99
    %p101 = scmp.ne.s32.totalorder %s90, %s91
    %p102 = scmp.eq.s32.totalorder %s14, 0
    %p103 = por %p101, %p102
    %p104 = scmp.ne.s32.totalorder %s90, %s91
    %p105 = scmp.eq.s32.totalorder %s15, 1
    %p106 = por %p104, %p105
    %p108 = scmp.ne.s32.totalorder %s91, %s107
    %p109 = scmp.eq.s32.totalorder %s15, 0
    %p110 = por %p108, %p109
    %p111 = scmp.le.s32.totalorder 1, %s9
    %p112 = scmp.lt.s32.totalorder %s9, 3
    %p113 = pnand %p111, %p112
    %p114 = pneg %p113
    // Predicated region
    $region9: #{tpu_custom_call.1} parent=5 // pred_check
      _
    $region10: #{tpu_custom_call.1} parent=5 // pred_check_branch
      %116 = sbr.rel (%p113) target = $region12
    $region11: #{tpu_custom_call.1} parent=5 // pred_region
      %s117 = ssub.s32 %s9, 1
      // Predicated region
      $region13: #{tpu_custom_call.1} parent=11 // pred_check
        %p118 = pneg %p56
      $region14: #{tpu_custom_call.1} parent=11 // pred_check_branch
        %120 = sbr.rel (%p118) target = $region16
      $region15: #{tpu_custom_call.1} parent=11 // pred_region
        _
      $region16: #{tpu_custom_call.1} parent=11 // pred_fallthru
        _
      // Predicated region
      $region17: #{tpu_custom_call.1} parent=11 // pred_check
        %p121 = pneg %p77
      $region18: #{tpu_custom_call.1} parent=11 // pred_check_branch
        %123 = sbr.rel (%p121) target = $region20
      $region19: #{tpu_custom_call.1} parent=11 // pred_region
        _
      $region20: #{tpu_custom_call.1} parent=11 // pred_fallthru
        _
    $region12: #{tpu_custom_call.1} parent=5 // pred_fallthru
      _
    %p124 = scmp.lt.s32.totalorder %s9, 2
    // Predicated region
    $region21: #{tpu_custom_call.1} parent=5 // pred_check
      %p125 = pneg %p124
    $region22: #{tpu_custom_call.1} parent=5 // pred_check_branch
      %127 = sbr.rel (%p125) target = $region24
    $region23: #{tpu_custom_call.1} parent=5 // pred_region
      // Predicated region
      $region25: #{tpu_custom_call.1} parent=23 // pred_check
        %p128 = pneg %p29
      $region26: #{tpu_custom_call.1} parent=23 // pred_check_branch
        %130 = sbr.rel (%p128) target = $region28
      $region27: #{tpu_custom_call.1} parent=23 // pred_region
        %s131 = smul.u32 8, %s9
        %p132 = scmp.lt.s32.totalorder %s131, 15
        %s133 = scalar_select %p132, %s131, 15
        %s134 = smul.addr %s133, 8
        %s135 = scalar_lea.vmem %s0, %s134
        %s136 = smul.u32 8, %s9
      $region28: #{tpu_custom_call.1} parent=23 // pred_fallthru
        _
    $region24: #{tpu_custom_call.1} parent=5 // pred_fallthru
      _
    %p137 = scmp.le.s32.totalorder 1, %s9
    %p138 = scmp.lt.s32.totalorder %s9, 3
    %p139 = pnand %p137, %p138
    %p140 = pneg %p139
    // Predicated region
    $region29: #{tpu_custom_call.1} parent=5 // pred_check
      _
    $region30: #{tpu_custom_call.1} parent=5 // pred_check_branch
      %142 = sbr.rel (%p139) target = $region32
    $region31: #{tpu_custom_call.1} parent=5 // pred_region
      %s143 = ssub.s32 %s9, 1
      %s144 = smul.u32 8, %s14
      %p145 = scmp.lt.s32.totalorder %s144, 15
      %s146 = scalar_select %p145, %s144, 15
      %s147 = smul.addr %s146, 8
      %s148 = scalar_lea.vmem %s0, %s147
      %p149 = pneg %p35
      %p150 = pneg %p32
      %p151 = pneg %p56
      %p152 = pneg %p53
      %p153 = pneg %p77
      %p154 = pneg %p74
      %p155 = pneg %p103
      %p156 = pneg %p100
      %s157 = smul.u32 8, %s14
      %p158 = scmp.lt.s32.totalorder %s157, 15
      %s159 = scalar_select %p158, %s157, 15
      %s160 = smul.addr %s159, 8
      %s161 = scalar_lea.vmem %s3, %s160
      %s162 = smul.u32 8, %s14
      %p163 = scmp.lt.s32.totalorder %s162, 15
      %s164 = scalar_select %p163, %s162, 15
      %s165 = smul.addr %s164, 8
      %s166 = scalar_lea.vmem %s0, %s165
      %s167 = smul.u32 8, %s14
      %s168 = smul.u32 8, %s14
      %p169 = scmp.lt.s32.totalorder %s168, 15
      %s170 = scalar_select %p169, %s168, 15
      %s171 = smul.addr %s170, 8
      %s172 = scalar_lea.vmem %s3, %s171
      %s173 = smul.u32 8, %s14
      %v174 = vld [vmem:[%s166] sm:$0xff]
      %v175 = vld [vmem:[%s166 + $0x8] sm:$0xff]
      %v176 = vld [vmem:[%s166 + $0x10] sm:$0xff]
      %v177 = vld [vmem:[%s166 + $0x18] sm:$0xff]
      %v178 = vld [vmem:[%s166 + $0x20] sm:$0xff]
      %v179 = vld [vmem:[%s166 + $0x28] sm:$0xff]
      %v180 = vld [vmem:[%s166 + $0x30] sm:$0xff]
      %v181 = vld [vmem:[%s166 + $0x38] sm:$0xff]
      %v182 = vld [vmem:[%s1] sm:$0xff]
      %v183 = vld [vmem:[%s1 + $0x8] sm:$0xff]
      %v184 = vld [vmem:[%s2] sm:$0x1]
      %v186 = vlaneseq
      %v187 = vshrl.u32 %v186, 7
      %v188 = vsub.s32 0, %v187
      %v189 = vrot.slane %v184, %v188
      %vm191 = vcmask 130048
      %v193 = vsel %vm191, %v174, 0
      %v196 = vsel %vm191, %v175, 0
      %v199 = vsel %vm191, %v176, 0
      %v202 = vsel %vm191, %v177, 0
      %v205 = vsel %vm191, %v178, 0
      %v208 = vsel %vm191, %v179, 0
      %v211 = vsel %vm191, %v180, 0
      %v214 = vsel %vm191, %v181, 0
      %216 = vmatprep.subr.mxu0 0.0
      %217 = vmatpush1.msra.mxu0 %v182
      %218 = vmatprep.subr.mxu0 0.0
      %219 = vmatpush1.msra.mxu0 %v183
      %220 = vmatprep.subr.mxu0 0.0
      %221 = vmatpush1.msra.mxu0 0.0
      %222 = vmatprep.subr.mxu0 0.0
      %223 = vmatpush1.msra.mxu0 0.0
      %224 = vmatprep.subr.mxu0 0.0
      %225 = vmatpush1.msra.mxu0 0.0
      %226 = vmatprep.subr.mxu0 0.0
      %227 = vmatpush1.msra.mxu0 0.0
      %228 = vmatprep.subr.mxu0 0.0
      %229 = vmatpush1.msra.mxu0 0.0
      %230 = vmatprep.subr.mxu0 0.0
      %231 = vmatpush1.msra.mxu0 0.0
      %232 = vmatprep.subr.mxu0 0.0
      %233 = vmatpush1.msra.mxu0 0.0
      %234 = vmatprep.subr.mxu0 0.0
      %235 = vmatpush1.msra.mxu0 0.0
      %236 = vmatprep.subr.mxu0 0.0
      %237 = vmatpush1.msra.mxu0 0.0
      %238 = vmatprep.subr.mxu0 0.0
      %239 = vmatpush1.msra.mxu0 0.0
      %240 = vmatprep.subr.mxu0 0.0
      %241 = vmatpush1.msra.mxu0 0.0
      %242 = vmatprep.subr.mxu0 0.0
      %243 = vmatpush1.msra.mxu0 0.0
      %244 = vmatprep.subr.mxu0 0.0
      %245 = vmatpush1.msra.mxu0 0.0
      %246 = vmatprep.subr.mxu0 0.0
      %247 = vmatpush1.msra.mxu0 0.0
      %248 = vmatprep.subr.mxu0 0.0
      %249 = vmatpush1.msra.mxu0 0.0
      %250 = vmatprep.subr.mxu0 0.0
      %251 = vmatpush1.msra.mxu0 0.0
      %252 = vmatprep.subr.mxu0 0.0
      %253 = vmatpush1.msra.mxu0 0.0
      %254 = vmatprep.subr.mxu0 0.0
      %255 = vmatpush1.msra.mxu0 0.0
      %256 = vmatprep.subr.mxu0 0.0
      %257 = vmatpush1.msra.mxu0 0.0
      %258 = vmatprep.subr.mxu0 0.0
      %259 = vmatpush1.msra.mxu0 0.0
      %260 = vmatprep.subr.mxu0 0.0
      %261 = vmatpush1.msra.mxu0 0.0
      %262 = vmatprep.subr.mxu0 0.0
      %263 = vmatpush1.msra.mxu0 0.0
      %264 = vmatprep.subr.mxu0 0.0
      %265 = vmatpush1.msra.mxu0 0.0
      %266 = vmatprep.subr.mxu0 0.0
      %267 = vmatpush1.msra.mxu0 0.0
      %268 = vmatprep.subr.mxu0 0.0
      %269 = vmatpush1.msra.mxu0 0.0
      %270 = vmatprep.subr.mxu0 0.0
      %271 = vmatpush1.msra.mxu0 0.0
      %272 = vmatprep.subr.mxu0 0.0
      %273 = vmatpush1.msra.mxu0 0.0
      %274 = vmatprep.subr.mxu0 0.0
      %275 = vmatpush1.msra.mxu0 0.0
      %276 = vmatprep.subr.mxu0 0.0
      %277 = vmatpush1.msra.mxu0 0.0
      %278 = vmatprep.subr.mxu0 0.0
      %279 = vmatpush1.msra.mxu0 0.0
      %280 = vmatprep.mubr.f32.mxu0 0.0
      %281 = vmatmul.mubr.f32.gmra.mrb[0].mxu0 %v193
      %v282 = vpop.f32.mrb[0].mxu0
      %v283 = vadd.f32 %v189, %v282
      %v284 = vpop.f32.mrb[0].mxu0
      %285 = vmatprep.mubr.f32.mxu0 0.0
      %286 = vmatmul.mubr.f32.gmra.mrb[0].mxu0 %v196
      %v287 = vpop.f32.mrb[0].mxu0
      %v288 = vadd.f32 %v189, %v287
      %v289 = vpop.f32.mrb[0].mxu0
      %290 = vmatprep.mubr.f32.mxu0 0.0
      %291 = vmatmul.mubr.f32.gmra.mrb[0].mxu0 %v199
      %v292 = vpop.f32.mrb[0].mxu0
      %v293 = vadd.f32 %v189, %v292
      %v294 = vpop.f32.mrb[0].mxu0
      %295 = vmatprep.mubr.f32.mxu0 0.0
      %296 = vmatmul.mubr.f32.gmra.mrb[0].mxu0 %v202
      %v297 = vpop.f32.mrb[0].mxu0
      %v298 = vadd.f32 %v189, %v297
      %v299 = vpop.f32.mrb[0].mxu0
      %300 = vmatprep.mubr.f32.mxu0 0.0
      %301 = vmatmul.mubr.f32.gmra.mrb[0].mxu0 %v205
      %v302 = vpop.f32.mrb[0].mxu0
      %v303 = vadd.f32 %v189, %v302
      %v304 = vpop.f32.mrb[0].mxu0
      %305 = vmatprep.mubr.f32.mxu0 0.0
      %306 = vmatmul.mubr.f32.gmra.mrb[0].mxu0 %v208
      %v307 = vpop.f32.mrb[0].mxu0
      %v308 = vadd.f32 %v189, %v307
      %v309 = vpop.f32.mrb[0].mxu0
      %310 = vmatprep.mubr.f32.mxu0 0.0
      %311 = vmatmul.mubr.f32.gmra.mrb[0].mxu0 %v211
      %v312 = vpop.f32.mrb[0].mxu0
      %v313 = vadd.f32 %v189, %v312
      %v314 = vpop.f32.mrb[0].mxu0
      %315 = vmatprep.mubr.f32.mxu0 0.0
      %316 = vmatmul.mubr.f32.gmra.mrb[0].mxu0 %v214
      %v317 = vpop.f32.mrb[0].mxu0
      %v318 = vadd.f32 %v189, %v317
      %v319 = vpop.f32.mrb[0].mxu0
      %320 = vdwg.mxu0
      %vm321 = vcmask 261120
      %322 = vst.msk [vmem:[%s172] sm:$0xff] %vm321, %v283
      %323 = vst.msk [vmem:[%s172 + $0x8] sm:$0xff] %vm321, %v288
      %324 = vst.msk [vmem:[%s172 + $0x10] sm:$0xff] %vm321, %v293
      %325 = vst.msk [vmem:[%s172 + $0x18] sm:$0xff] %vm321, %v298
      %326 = vst.msk [vmem:[%s172 + $0x20] sm:$0xff] %vm321, %v303
      %327 = vst.msk [vmem:[%s172 + $0x28] sm:$0xff] %vm321, %v308
      %328 = vst.msk [vmem:[%s172 + $0x30] sm:$0xff] %vm321, %v313
      %329 = vst.msk [vmem:[%s172 + $0x38] sm:$0xff] %vm321, %v318
      %s330 = smul.u32 8, %s14
      %p331 = scmp.lt.s32.totalorder %s330, 15
      %s332 = scalar_select %p331, %s330, 15
      %s333 = smul.addr %s332, 8
      %s334 = scalar_lea.vmem %s3, %s333
      // Predicated region
      $region33: #{tpu_custom_call.1} parent=31 // pred_check
        %p335 = pneg %p100
      $region34: #{tpu_custom_call.1} parent=31 // pred_check_branch
        %337 = sbr.rel (%p335) target = $region36
      $region35: #{tpu_custom_call.1} parent=31 // pred_region
        %s338 = smul.u32 8, %s14
      $region36: #{tpu_custom_call.1} parent=31 // pred_fallthru
        _
    $region32: #{tpu_custom_call.1} parent=5 // pred_fallthru
      _
    %p339 = scmp.le.s32.totalorder 2, %s9
    // Predicated region
    $region37: #{tpu_custom_call.1} parent=5 // pred_check
      %p340 = pneg %p339
    $region38: #{tpu_custom_call.1} parent=5 // pred_check_branch
      %342 = sbr.rel (%p340) target = $region40
    $region39: #{tpu_custom_call.1} parent=5 // pred_region
      %s343 = ssub.s32 %s9, 2
      // Predicated region
      $region41: #{tpu_custom_call.1} parent=39 // pred_check
        %p344 = pneg %p106
      $region42: #{tpu_custom_call.1} parent=39 // pred_check_branch
        %346 = sbr.rel (%p344) target = $region44
      $region43: #{tpu_custom_call.1} parent=39 // pred_region
        %s347 = smul.u32 8, %s15
        %p348 = scmp.lt.s32.totalorder %s347, 15
        %s349 = scalar_select %p348, %s347, 15
        %s350 = smul.addr %s349, 8
        %s351 = scalar_lea.vmem %s3, %s350
      $region44: #{tpu_custom_call.1} parent=39 // pred_fallthru
        _
    $region40: #{tpu_custom_call.1} parent=5 // pred_fallthru
      _
  $region6: #{tpu_custom_call.1} parent=0 // loop_footer
    %s13 = sadd.s32 1, %s9
  $region7: #{tpu_custom_call.1} parent=0 // loop_footer_branch
    %8 = sbr.rel target = $region3
  $region8: #{tpu_custom_call.1} parent=0 // loop_exit
    _

</llo_original>
